<compile_context>
chip_gen: v6e
topology: v6e:2x2x1
jax: 0.10.0
libtpu: 0.0.40
codegen_flags: <defaults>
</compile_context>

<pallas_src>
import math

import jax
import jax.numpy as jnp
import numpy as np
from jax.experimental import pallas as pl
from jax.experimental.pallas import tpu as pltpu

_LANE = 128                     # TPU lane width
_PALLAS_MIN_BYTES = 128 * 1024  # below this, per-grid-step overhead dominates


def _round_up(x: int, m: int) -> int:
    return ((x + m - 1) // m) * m


def _vmem_budget_bytes() -> int:
    """Per-generation scoped-VMEM budget for this kernel's blocks.

    v7x has 64 MiB physical VMEM per TensorCore; v5e/v6e have 128 MiB.  Take
    ~3/4 of physical (leaves compiler-scratch headroom), with a conservative
    v7x-safe default if the hardware query is unavailable.
    """
    budget = 48 * 1024 * 1024
    try:
        phys = int(pltpu.get_tpu_info().vmem_capacity_bytes)
        budget = max(16 * 1024 * 1024, min(phys * 3 // 4, 96 * 1024 * 1024))
    except Exception:
        pass
    return budget


def _choose_tiles(L: int, D: int, itemsize: int, budget: int, n_batch: int):
    """Pick (tL, tD) block sizes.

    Prefer a whole (L, D) slab per grid step (fully contiguous HBM DMAs on
    both sides, fewest grid steps).  Shrink tD first (keeps full-L output
    stores contiguous), then tL, in multiples of 128, until the
    double-buffered in+out blocks fit the per-generation VMEM budget.
    When N < 2, force the D axis into >= 2 blocks so the 2-TC megacore has a
    parallel axis of extent >= 2 to shard.
    """
    blocks_budget = (budget * 7) // 8  # headroom inside the scoped limit

    def fits(tl: int, td: int) -> bool:
        # 2 input buffers + 2 output buffers (double-buffered pipeline).
        return 4 * tl * td * itemsize <= blocks_budget

    tL, tD = L, D

    # Megacore: guarantee a >=2-extent parallel grid axis for N == 1.
    if n_batch < 2 and D > _LANE:
        tD = max(_LANE, _round_up(pl.cdiv(D, 2), _LANE))

    # Shrink the D tile (multiples of 128) until the slab fits VMEM.
    while not fits(tL, tD) and tD > _LANE:
        tD = max(_LANE, _round_up(tD // 2, _LANE))
    # If a full-L column of 128 channels still doesn't fit, tile L too.
    while not fits(tL, tD) and tL > _LANE:
        tL = max(_LANE, _round_up(tL // 2, _LANE))

    return tL, tD


def _vit_reshape_kernel(x_ref, o_ref):
    # x_ref: (tL, tD) input block, o_ref: (tD, tL) output block.
    # The nhwd -> ndhw permutation reduces to a per-tile (L, D) -> (D, L)
    # transpose; write it straight to the output block (no scratch round-trip)
    # so it lowers to the clean 2-D XLU vxpose path with a single store stream.
    o_ref[...] = x_ref[...].T


def vit_reshape(x: jax.Array) -> jax.Array:
    """x: (N, L, D) with L a perfect square -> (N, D, H, W)."""
    N, L, D = x.shape
    H = W = math.isqrt(L)
    assert H * W == L, "L must be a perfect square"

    itemsize = jnp.dtype(x.dtype).itemsize

    # Tiny-shape regime: the whole problem is a few hundred KB or less; a
    # Pallas grid would be ~100% fixed per-step overhead.  Let XLA handle it.
    if N * L * D * itemsize < _PALLAS_MIN_BYTES:
        return jnp.transpose(x, (0, 2, 1)).reshape(N, D, H, W)

    budget = _vmem_budget_bytes()
    tL, tD = _choose_tiles(L, D, itemsize, budget, N)

    # Ragged boundaries (L % tL != 0 or D % tD != 0) are handled by Pallas:
    # padded read on the boundary input block, masked store on the single
    # boundary output block.  No wrapper pad / slice HBM passes.
    grid = (N, pl.cdiv(D, tD), pl.cdiv(L, tL))

    out_nld = pl.pallas_call(
        _vit_reshape_kernel,
        out_shape=jax.ShapeDtypeStruct((N, D, L), x.dtype),
        grid_spec=pltpu.PrefetchScalarGridSpec(
            num_scalar_prefetch=0,
            grid=grid,
            in_specs=[pl.BlockSpec((pl.Squeezed(), tL, tD),
                                   lambda n, d, l: (n, l, d))],
            out_specs=pl.BlockSpec((pl.Squeezed(), tD, tL),
                                   lambda n, d, l: (n, d, l)),
        ),
        compiler_params=pltpu.CompilerParams(
            dimension_semantics=("parallel", "parallel", "parallel"),
            vmem_limit_bytes=budget,
        ),
        cost_estimate=pl.CostEstimate(
            flops=0,
            transcendentals=0,
            bytes_accessed=2 * N * L * D * itemsize,
        ),
    )(x)

    # Free row-major reinterpretation (N, D, L) -> (N, D, H, W).
    return out_nld.reshape(N, D, H, W)


if __name__ == "__main__":
    key = jax.random.PRNGKey(0)

    # (N, H(=W), D): covers the XLA tiny path, the aligned whole-slab Pallas
    # path, the ViT-ish non-128-multiple-L path (boundary masking only, no
    # pad/slice), the N=1 megacore D-split path, and a ragged-D boundary path.
    cases = [
        (2, 8, 32),     # tiny: L=64, D=32 -> XLA fallback path
        (2, 16, 128),   # aligned: L=256, D=128 -> whole-slab Pallas path
        (2, 14, 768),   # ViT-ish: L=196, D=768 -> whole (L, D) slab per batch
        (1, 14, 768),   # N=1 -> D split into 2 blocks (megacore axis)
        (1, 16, 200),   # ragged D -> partial boundary D-block (masked store)
    ]

    for (N, HW, D) in cases:
        L = HW * HW
        key, sub = jax.random.split(key)
        x = jax.random.normal(sub, (N, L, D), dtype=jnp.float32)

        out = jax.block_until_ready(vit_reshape(x))

        # Reference: exact PyTorch semantics (reshape + nhwd->ndhw permute).
        ref = np.asarray(x).reshape(N, HW, HW, D).transpose(0, 3, 1, 2)
        assert out.shape == (N, D, HW, HW), out.shape
        np.testing.assert_allclose(np.asarray(out), ref, rtol=0, atol=0)

    print("KERNEL_OK")
</pallas_src>

<mosaic_0001>
module attributes {stable_mosaic.version = 11 : i64} {
  func.func @_vit_reshape_kernel(%arg0: i32, %arg1: i32, %arg2: i32, %arg3: memref<1x256x128xf32, #tpu.memory_space<vmem>>, %arg4: memref<1x128x256xf32, #tpu.memory_space<vmem>>) attributes {dimension_semantics = [#tpu.dimension_semantics<parallel>, #tpu.dimension_semantics<parallel>, #tpu.dimension_semantics<parallel>], iteration_bounds = array<i64: 2, 1, 1>, scalar_prefetch = 0 : i64, scratch_operands = 0 : i64, tpu.core_type = #tpu.core_type<tc>, window_params = [{transform_indices = @transform_0, window_bounds = array<i64: 1, 256, 128>}, {transform_indices = @transform_1, window_bounds = array<i64: 1, 128, 256>}]} {
    %c0 = arith.constant 0 : index
    %c0_0 = arith.constant 0 : index
    %c0_1 = arith.constant 0 : index
    %0 = vector.load %arg3[%c0, %c0_0, %c0_1] : memref<1x256x128xf32, #tpu.memory_space<vmem>>, vector<1x256x128xf32>
    %1 = vector.shape_cast %0 : vector<1x256x128xf32> to vector<256x128xf32>
    %2 = tpu.transpose %1, [1, 0] : vector<256x128xf32> -> vector<128x256xf32>
    %c0_2 = arith.constant 0 : index
    %c0_3 = arith.constant 0 : index
    %c0_4 = arith.constant 0 : index
    %3 = vector.load %arg4[%c0_2, %c0_3, %c0_4] : memref<1x128x256xf32, #tpu.memory_space<vmem>>, vector<1x128x256xf32>
    %4 = vector.shape_cast %3 : vector<1x128x256xf32> to vector<128x256xf32>
    %5 = vector.shape_cast %2 : vector<128x256xf32> to vector<1x128x256xf32>
    tpu.vector_store %arg4[%c0_2, %c0_3, %c0_4], %5 {strides = array<i32>} : memref<1x128x256xf32, #tpu.memory_space<vmem>>, vector<1x128x256xf32>,
    return
  }
  func.func @transform_0(%arg0: i32, %arg1: i32, %arg2: i32) -> (i32, i32, i32) {
    %c0_i32 = arith.constant 0 : i32
    return %arg0, %arg2, %arg1 : i32, i32, i32
  }
  func.func @transform_1(%arg0: i32, %arg1: i32, %arg2: i32) -> (i32, i32, i32) {
    %c0_i32 = arith.constant 0 : i32
    return %arg0, %arg1, %arg2 : i32, i32, i32
  }
}

</mosaic_0001>

<llo_original>
// kernel: tpu_custom_call.1
$region0: #{tpu_custom_call.1}
  #allocation0 [shape = 'u32[]', space=smem, size = 0x4, offset = 0x4, fixed_abs, tag = 'smem constant byte address 0x4 - core index']
  #allocation1 [shape = 'u32[144,128]{1,0:T(1,128)}', space=vmem, size = 0x12000, scoped, tag = 'internal scratch']
  %s0 = inlined_call_operand.hbm [shape: f32[2,256,128], index: 0, kind: input, shape index: {}]
  %s1 = inlined_call_operand.hbm [shape: f32[2,128,256], index: 1, kind: output, shape index: {}]
  %s2 = sld [smem:[#allocation0]]
  $region41: #{tpu_custom_call.1} parent=0
    _
  %s4 = ssub.s32 1, %s2
  %s5 = scalar_select 0, %s4, %s2
  $region1: #{tpu_custom_call.1} parent=0
    #allocation2 [shape = 'u8[262144]{0}', space=vmem, size = 0x40000, scoped, tag = 'input window, operand 0']
    #allocation3 [shape = 's32[2]{0}', space=sflag, size = 0x8, scoped, tag = 'scoped memory for tpu_custom_call.1']
    #allocation4 [shape = 's32[2]{0}', space=sflag, size = 0x8, scoped, tag = 'scoped memory for tpu_custom_call.1']
    #allocation5 [shape = 'u8[262144]{0}', space=vmem, size = 0x40000, scoped, tag = 'output window, operand 0']
    %6 = vsyncpa [#allocation3], 0
    %s7 = scalar_lea.sflag [#allocation3], 1
    %8 = vsyncpa %s7, 0
    %9 = vsyncpa [#allocation4], 0
    %s10 = scalar_lea.sflag [#allocation4], 1
    %11 = vsyncpa %s10, 0
    loop: start=0, step=1, limit=4
    $region2: #{tpu_custom_call.1} parent=1 // loop_pre_header
      _
    $region3: #{tpu_custom_call.1} parent=1 // loop_header
      %s13 = sphi 0, %s17
      %p14 = scmp.ge.s32.totalorder %s13, 4
      %s20 = sphi 0, %s39
      %s21 = sphi 0, %s35
      %s22 = sphi 0, %s31
      %s23 = sphi 0, %s20
      %s24 = sphi 0, %s21
      %s25 = sphi 0, %s22
      %s26 = sphi 0, %s23
      %s27 = sphi 0, %s24
      %s28 = sphi 0, %s25
      %s46 = sphi 0, %s48
      %s49 = sphi 0, %s46
      %s50 = sphi 0, %s49
      %s66 = sphi 0, %s50
      %s76 = sphi 0, %s78
      %s79 = sphi 0, %s76
      %s80 = sphi 0, %s79
      %s96 = sphi 0, %s80
    $region4: #{tpu_custom_call.1} parent=1 // loop_header_branch
      %16 = sbr.rel (%p14) target = $region8
    $region5: #{tpu_custom_call.1} parent=1 // loop_body
      %s18 = ssub.s32 %s13, 1
      %s19 = ssub.s32 %s13, 2
      %s29 = sadd.s32 1, %s22
      %p30 = scmp.ge.s32.totalorder %s29, 1
      %s31 = scalar_select %p30, 0, %s29
      %s32 = sadd.s32 1, %s21
      %s33 = scalar_select %p30, %s32, %s21
      %p34 = scmp.ge.s32.totalorder %s33, 1
      %s35 = scalar_select %p34, 0, %s33
      %s36 = sadd.s32 1, %s20
      %s37 = scalar_select %p34, %s36, %s20
      %p38 = scmp.ge.s32.totalorder %s37, 2
      %s39 = scalar_select %p38, 0, %s37
      %s40 = ssub.s32 %s20, %s39
      %s41 = ssub.s32 %s22, %s31
      %s42 = sor.u32 %s40, %s41
      %s43 = ssub.s32 %s21, %s35
      %s44 = sor.u32 %s42, %s43
      %p45 = scmp.eq.s32.totalorder %s44, 0
      %s47 = sadd.s32 %s46, 1
      %s48 = scalar_select %p45, %s46, %s47
      %p51 = pneg %p45
      %p52 = scmp.eq.s32.totalorder %s13, 1
      %p53 = por %p51, %p52
      %p54 = scmp.ne.s32.totalorder %s46, %s49
      %p55 = scmp.eq.s32.totalorder %s13, 0
      %p56 = por %p54, %p55
      %p57 = scmp.ne.s32.totalorder %s46, %s49
      %p58 = scmp.eq.s32.totalorder %s18, 1
      %p59 = por %p57, %p58
      %p60 = scmp.ne.s32.totalorder %s49, %s50
      %p61 = scmp.eq.s32.totalorder %s18, 0
      %p62 = por %p60, %p61
      %p63 = scmp.ne.s32.totalorder %s49, %s50
      %p64 = scmp.eq.s32.totalorder %s19, 1
      %p65 = por %p63, %p64
      %p67 = scmp.ne.s32.totalorder %s50, %s66
      %p68 = scmp.eq.s32.totalorder %s19, 0
      %p69 = por %p67, %p68
      %s70 = ssub.s32 %s20, %s39
      %s71 = ssub.s32 %s21, %s35
      %s72 = sor.u32 %s70, %s71
      %s73 = ssub.s32 %s22, %s31
      %s74 = sor.u32 %s72, %s73
      %p75 = scmp.eq.s32.totalorder %s74, 0
      %s77 = sadd.s32 %s76, 1
      %s78 = scalar_select %p75, %s76, %s77
      %p81 = pneg %p75
      %p82 = scmp.eq.s32.totalorder %s13, 1
      %p83 = por %p81, %p82
      %p84 = scmp.ne.s32.totalorder %s76, %s79
      %p85 = scmp.eq.s32.totalorder %s13, 0
      %p86 = por %p84, %p85
      %p87 = scmp.ne.s32.totalorder %s76, %s79
      %p88 = scmp.eq.s32.totalorder %s18, 1
      %p89 = por %p87, %p88
      %p90 = scmp.ne.s32.totalorder %s79, %s80
      %p91 = scmp.eq.s32.totalorder %s18, 0
      %p92 = por %p90, %p91
      %p93 = scmp.ne.s32.totalorder %s79, %s80
      %p94 = scmp.eq.s32.totalorder %s19, 1
      %p95 = por %p93, %p94
      %p97 = scmp.ne.s32.totalorder %s80, %s96
      %p98 = scmp.eq.s32.totalorder %s19, 0
      %p99 = por %p97, %p98
      %p100 = scmp.le.s32.totalorder 1, %s13
      %p101 = scmp.lt.s32.totalorder %s13, 3
      %p102 = pnand %p100, %p101
      %p103 = pneg %p102
      // Predicated region
      $region9: #{tpu_custom_call.1} parent=5 // pred_check
        _
      $region10: #{tpu_custom_call.1} parent=5 // pred_check_branch
        %105 = sbr.rel (%p102) target = $region12
      $region11: #{tpu_custom_call.1} parent=5 // pred_region
        %s106 = ssub.s32 %s13, 1
      $region12: #{tpu_custom_call.1} parent=5 // pred_fallthru
        _
      %p107 = scmp.lt.s32.totalorder %s13, 2
      // Predicated region
      $region13: #{tpu_custom_call.1} parent=5 // pred_check
        %p108 = pneg %p107
      $region14: #{tpu_custom_call.1} parent=5 // pred_check_branch
        %110 = sbr.rel (%p108) target = $region16
      $region15: #{tpu_custom_call.1} parent=5 // pred_region
        // Predicated region
        $region17: #{tpu_custom_call.1} parent=15 // pred_check
          %p111 = pneg %p56
        $region18: #{tpu_custom_call.1} parent=15 // pred_check_branch
          %113 = sbr.rel (%p111) target = $region20
        $region19: #{tpu_custom_call.1} parent=15 // pred_region
          %s114 = sand.u32 %s46, 1
          %s115 = scalar_lea.sflag [#allocation3], %s114
          %s116 = sand.u32 %s46, 1
          %s117 = smul.addr %s116, 256
          %s118 = scalar_lea.vmem [#allocation2], %s117
          %s119 = smul.u32 32, %s22
          %s121 = ssub.s32 4096, 4096
          %122 = vsyncadd %s115, %s121
          %s123 = sadd.s32 %s21, %s119
          %s124 = smul.addr %s20, 32
          %s125 = sadd.s32 %s123, %s124
          %s126 = smul.addr %s125, 128
          %s127 = scalar_lea.hbm %s0, %s126
          %s128 = sshll.u32 %s118, 4
          %s129 = int_to_ptr.vmem [resolvable:$true] %s128
          %134 = dma.hbm_to_vmem [thread:$0]  %s127, 4096, %s129, %s115, 128, 128, 8
        $region20: #{tpu_custom_call.1} parent=15 // pred_fallthru
          _
      $region16: #{tpu_custom_call.1} parent=5 // pred_fallthru
        _
      %p135 = scmp.le.s32.totalorder 1, %s13
      %p136 = scmp.lt.s32.totalorder %s13, 3
      %p137 = pnand %p135, %p136
      %p138 = pneg %p137
      // Predicated region
      $region21: #{tpu_custom_call.1} parent=5 // pred_check
        _
      $region22: #{tpu_custom_call.1} parent=5 // pred_check_branch
        %140 = sbr.rel (%p137) target = $region24
      $region23: #{tpu_custom_call.1} parent=5 // pred_region
        %s141 = ssub.s32 %s13, 1
        %s142 = sand.u32 %s49, 1
        %s143 = scalar_lea.sflag [#allocation3], %s142
        %s144 = sand.u32 %s49, 1
        %s145 = smul.addr %s144, 256
        %s146 = scalar_lea.vmem [#allocation2], %s145
        // Predicated region
        $region25: #{tpu_custom_call.1} parent=23 // pred_check
          %p147 = pneg %p62
        $region26: #{tpu_custom_call.1} parent=23 // pred_check_branch
          %149 = sbr.rel (%p147) target = $region28
        $region27: #{tpu_custom_call.1} parent=23 // pred_region
          %150 = dma.done %s143, 4096
        $region28: #{tpu_custom_call.1} parent=23 // pred_fallthru
          _
        %s151 = sand.u32 %s49, 1
        %s152 = scalar_lea.sflag [#allocation3], %s151
        %s153 = sand.u32 %s49, 1
        %s154 = smul.addr %s153, 256
        %s155 = scalar_lea.vmem [#allocation2], %s154
        %p156 = pneg %p62
        %p157 = pneg %p59
        %p158 = pneg %p92
        %p159 = pneg %p89
        %s160 = sand.u32 %s79, 1
        %s161 = scalar_lea.sflag [#allocation4], %s160
        %s162 = sand.u32 %s79, 1
        %s163 = smul.addr %s162, 256
        %s164 = scalar_lea.vmem [#allocation5], %s163
        %s165 = smul.u32 32, %s25
        %s166 = smul.u32 16, %s24
        %s167 = smul.u32 2, %s25
        %v168 = vld [vmem:[%s146] sm:$0xff]
        %v169 = vld [vmem:[%s146 + $0x8] sm:$0xff]
        %v170 = vld [vmem:[%s146 + $0x10] sm:$0xff]
        %v171 = vld [vmem:[%s146 + $0x18] sm:$0xff]
        %v172 = vld [vmem:[%s146 + $0x20] sm:$0xff]
        %v173 = vld [vmem:[%s146 + $0x28] sm:$0xff]
        %v174 = vld [vmem:[%s146 + $0x30] sm:$0xff]
        %v175 = vld [vmem:[%s146 + $0x38] sm:$0xff]
        %v176 = vld [vmem:[%s146 + $0x40] sm:$0xff]
        %v177 = vld [vmem:[%s146 + $0x48] sm:$0xff]
        %v178 = vld [vmem:[%s146 + $0x50] sm:$0xff]
        %v179 = vld [vmem:[%s146 + $0x58] sm:$0xff]
        %v180 = vld [vmem:[%s146 + $0x60] sm:$0xff]
        %v181 = vld [vmem:[%s146 + $0x68] sm:$0xff]
        %v182 = vld [vmem:[%s146 + $0x70] sm:$0xff]
        %v183 = vld [vmem:[%s146 + $0x78] sm:$0xff]
        %v184 = vld [vmem:[%s146 + $0x80] sm:$0xff]
        %v185 = vld [vmem:[%s146 + $0x88] sm:$0xff]
        %v186 = vld [vmem:[%s146 + $0x90] sm:$0xff]
        %v187 = vld [vmem:[%s146 + $0x98] sm:$0xff]
        %v188 = vld [vmem:[%s146 + $0xa0] sm:$0xff]
        %v189 = vld [vmem:[%s146 + $0xa8] sm:$0xff]
        %v190 = vld [vmem:[%s146 + $0xb0] sm:$0xff]
        %v191 = vld [vmem:[%s146 + $0xb8] sm:$0xff]
        %v192 = vld [vmem:[%s146 + $0xc0] sm:$0xff]
        %v193 = vld [vmem:[%s146 + $0xc8] sm:$0xff]
        %v194 = vld [vmem:[%s146 + $0xd0] sm:$0xff]
        %v195 = vld [vmem:[%s146 + $0xd8] sm:$0xff]
        %v196 = vld [vmem:[%s146 + $0xe0] sm:$0xff]
        %v197 = vld [vmem:[%s146 + $0xe8] sm:$0xff]
        %v198 = vld [vmem:[%s146 + $0xf0] sm:$0xff]
        %v199 = vld [vmem:[%s146 + $0xf8] sm:$0xff]
        %200 = vxpose.xlu0.b32.start [1/16] %v168, 128
        %201 = vxpose.xlu0.b32.cont [2/16] %v169, 128
        %202 = vxpose.xlu0.b32.cont [3/16] %v170, 128
        %203 = vxpose.xlu0.b32.cont [4/16] %v171, 128
        %204 = vxpose.xlu0.b32.cont [5/16] %v172, 128
        %205 = vxpose.xlu0.b32.cont [6/16] %v173, 128
        %206 = vxpose.xlu0.b32.cont [7/16] %v174, 128
        %207 = vxpose.xlu0.b32.cont [8/16] %v175, 128
        %208 = vxpose.xlu0.b32.cont [9/16] %v176, 128
        %209 = vxpose.xlu0.b32.cont [10/16] %v177, 128
        %210 = vxpose.xlu0.b32.cont [11/16] %v178, 128
        %211 = vxpose.xlu0.b32.cont [12/16] %v179, 128
        %212 = vxpose.xlu0.b32.cont [13/16] %v180, 128
        %213 = vxpose.xlu0.b32.cont [14/16] %v181, 128
        %214 = vxpose.xlu0.b32.cont [15/16] %v182, 128
        %215 = vxpose.xlu0.b32.end [16/16] %v183, 128
        %v216 = vpop.trf.xlu0
        %v217 = vpop.trf.xlu0
        %v218 = vpop.trf.xlu0
        %v219 = vpop.trf.xlu0
        %v220 = vpop.trf.xlu0
        %v221 = vpop.trf.xlu0
        %v222 = vpop.trf.xlu0
        %v223 = vpop.trf.xlu0
        %v224 = vpop.trf.xlu0
        %v225 = vpop.trf.xlu0
        %v226 = vpop.trf.xlu0
        %v227 = vpop.trf.xlu0
        %v228 = vpop.trf.xlu0
        %v229 = vpop.trf.xlu0
        %v230 = vpop.trf.xlu0
        %v231 = vpop.trf.xlu0
        %232 = vxpose.xlu0.b32.start [1/16] %v184, 128
        %233 = vxpose.xlu0.b32.cont [2/16] %v185, 128
        %234 = vxpose.xlu0.b32.cont [3/16] %v186, 128
        %235 = vxpose.xlu0.b32.cont [4/16] %v187, 128
        %236 = vxpose.xlu0.b32.cont [5/16] %v188, 128
        %237 = vxpose.xlu0.b32.cont [6/16] %v189, 128
        %238 = vxpose.xlu0.b32.cont [7/16] %v190, 128
        %239 = vxpose.xlu0.b32.cont [8/16] %v191, 128
        %240 = vxpose.xlu0.b32.cont [9/16] %v192, 128
        %241 = vxpose.xlu0.b32.cont [10/16] %v193, 128
        %242 = vxpose.xlu0.b32.cont [11/16] %v194, 128
        %243 = vxpose.xlu0.b32.cont [12/16] %v195, 128
        %244 = vxpose.xlu0.b32.cont [13/16] %v196, 128
        %245 = vxpose.xlu0.b32.cont [14/16] %v197, 128
        %246 = vxpose.xlu0.b32.cont [15/16] %v198, 128
        %247 = vxpose.xlu0.b32.end [16/16] %v199, 128
        %v248 = vpop.trf.xlu0
        %v249 = vpop.trf.xlu0
        %v250 = vpop.trf.xlu0
        %v251 = vpop.trf.xlu0
        %v252 = vpop.trf.xlu0
        %v253 = vpop.trf.xlu0
        %v254 = vpop.trf.xlu0
        %v255 = vpop.trf.xlu0
        %v256 = vpop.trf.xlu0
        %v257 = vpop.trf.xlu0
        %v258 = vpop.trf.xlu0
        %v259 = vpop.trf.xlu0
        %v260 = vpop.trf.xlu0
        %v261 = vpop.trf.xlu0
        %v262 = vpop.trf.xlu0
        %v263 = vpop.trf.xlu0
        %264 = vst [vmem:[%s164] sm:$0xff] %v216
        %265 = vst [vmem:[%s164 + $0x8] sm:$0xff] %v248
        %266 = vst [vmem:[%s164 + $0x10] sm:$0xff] %v217
        %267 = vst [vmem:[%s164 + $0x18] sm:$0xff] %v249
        %268 = vst [vmem:[%s164 + $0x20] sm:$0xff] %v218
        %269 = vst [vmem:[%s164 + $0x28] sm:$0xff] %v250
        %270 = vst [vmem:[%s164 + $0x30] sm:$0xff] %v219
        %271 = vst [vmem:[%s164 + $0x38] sm:$0xff] %v251
        %272 = vst [vmem:[%s164 + $0x40] sm:$0xff] %v220
        %273 = vst [vmem:[%s164 + $0x48] sm:$0xff] %v252
        %274 = vst [vmem:[%s164 + $0x50] sm:$0xff] %v221
        %275 = vst [vmem:[%s164 + $0x58] sm:$0xff] %v253
        %276 = vst [vmem:[%s164 + $0x60] sm:$0xff] %v222
        %277 = vst [vmem:[%s164 + $0x68] sm:$0xff] %v254
        %278 = vst [vmem:[%s164 + $0x70] sm:$0xff] %v223
        %279 = vst [vmem:[%s164 + $0x78] sm:$0xff] %v255
        %280 = vst [vmem:[%s164 + $0x80] sm:$0xff] %v224
        %281 = vst [vmem:[%s164 + $0x88] sm:$0xff] %v256
        %282 = vst [vmem:[%s164 + $0x90] sm:$0xff] %v225
        %283 = vst [vmem:[%s164 + $0x98] sm:$0xff] %v257
        %284 = vst [vmem:[%s164 + $0xa0] sm:$0xff] %v226
        %285 = vst [vmem:[%s164 + $0xa8] sm:$0xff] %v258
        %286 = vst [vmem:[%s164 + $0xb0] sm:$0xff] %v227
        %287 = vst [vmem:[%s164 + $0xb8] sm:$0xff] %v259
        %288 = vst [vmem:[%s164 + $0xc0] sm:$0xff] %v228
        %289 = vst [vmem:[%s164 + $0xc8] sm:$0xff] %v260
        %290 = vst [vmem:[%s164 + $0xd0] sm:$0xff] %v229
        %291 = vst [vmem:[%s164 + $0xd8] sm:$0xff] %v261
        %292 = vst [vmem:[%s164 + $0xe0] sm:$0xff] %v230
        %293 = vst [vmem:[%s164 + $0xe8] sm:$0xff] %v262
        %294 = vst [vmem:[%s164 + $0xf0] sm:$0xff] %v231
        %295 = vst [vmem:[%s164 + $0xf8] sm:$0xff] %v263
        %s296 = sand.u32 %s79, 1
        %s297 = scalar_lea.sflag [#allocation4], %s296
        %s298 = sand.u32 %s79, 1
        %s299 = smul.addr %s298, 256
        %s300 = scalar_lea.vmem [#allocation5], %s299
        // Predicated region
        $region29: #{tpu_custom_call.1} parent=23 // pred_check
          %p301 = pneg %p89
        $region30: #{tpu_custom_call.1} parent=23 // pred_check_branch
          %303 = sbr.rel (%p301) target = $region32
        $region31: #{tpu_custom_call.1} parent=23 // pred_region
          %s304 = smul.u32 16, %s24
          %s305 = smul.u32 2, %s25
          %s307 = ssub.s32 4096, 4096
          %308 = vsyncadd %s297, %s307
          %s309 = smul.addr %s304, 2
          %s310 = sadd.s32 %s305, %s309
          %s311 = smul.addr %s23, 32
          %s312 = sadd.s32 %s310, %s311
          %s313 = smul.addr %s312, 128
          %s314 = scalar_lea.hbm %s1, %s313
          %s315 = sshll.u32 %s300, 4
          %s316 = int_to_ptr.vmem [resolvable:$true] %s315
          %321 = dma.vmem_to_hbm [thread:$0]  %s316, 4096, %s314, %s297, 256, 256, 16
        $region32: #{tpu_custom_call.1} parent=23 // pred_fallthru
          _
      $region24: #{tpu_custom_call.1} parent=5 // pred_fallthru
        _
      %p322 = scmp.le.s32.totalorder 2, %s13
      // Predicated region
      $region33: #{tpu_custom_call.1} parent=5 // pred_check
        %p323 = pneg %p322
      $region34: #{tpu_custom_call.1} parent=5 // pred_check_branch
        %325 = sbr.rel (%p323) target = $region36
      $region35: #{tpu_custom_call.1} parent=5 // pred_region
        %s326 = ssub.s32 %s13, 2
        // Predicated region
        $region37: #{tpu_custom_call.1} parent=35 // pred_check
          %p327 = pneg %p95
        $region38: #{tpu_custom_call.1} parent=35 // pred_check_branch
          %329 = sbr.rel (%p327) target = $region40
        $region39: #{tpu_custom_call.1} parent=35 // pred_region
          %s330 = sand.u32 %s80, 1
          %s331 = scalar_lea.sflag [#allocation4], %s330
          %s332 = sand.u32 %s80, 1
          %s333 = smul.addr %s332, 256
          %s334 = scalar_lea.vmem [#allocation5], %s333
          %335 = dma.done %s331, 4096
        $region40: #{tpu_custom_call.1} parent=35 // pred_fallthru
          _
      $region36: #{tpu_custom_call.1} parent=5 // pred_fallthru
        _
    $region6: #{tpu_custom_call.1} parent=1 // loop_footer
      %s17 = sadd.s32 1, %s13
    $region7: #{tpu_custom_call.1} parent=1 // loop_footer_branch
      %12 = sbr.rel target = $region3
    $region8: #{tpu_custom_call.1} parent=1 // loop_exit
      _
    %336 = vsyncpa [#allocation3], 1
    %s337 = scalar_lea.sflag [#allocation3], 1
    %338 = vsyncpa %s337, 1
    %339 = vsyncpa [#allocation4], 1
    %s340 = scalar_lea.sflag [#allocation4], 1
    %341 = vsyncpa %s340, 1

</llo_original>
